<compile_context>
chip_gen: v5e
topology: v5e:2x2
jax: 0.10.0
libtpu: 0.0.40
codegen_flags: <defaults>
</compile_context>

<pallas_src>
import functools

import jax
import jax.numpy as jnp
import numpy as np
from jax import lax
from jax.experimental import pallas as pl
from jax.experimental.pallas import tpu as pltpu


def _round_up(x, m):
    return ((x + m - 1) // m) * m


def _round_down(x, m):
    return (x // m) * m


def _pair_geometry(pack_ref, scale):
    """Unpack one streamed (8, TILE_P) tile -> (idx_i, idx_j, pair weight)."""
    pk = pack_ref[...]                                    # (8, TILE_P) f32
    vx = pk[0:1, :]
    vy = pk[1:2, :]
    vz = pk[2:3, :]
    d2 = vx * vx + vy * vy + vz * vz                      # (1, TILE_P) pure VPU adds
    pk_i32 = pltpu.bitcast(pk, jnp.int32)                 # same-width reinterpret
    idx_i = pk_i32[3:4, :]                                # (1, TILE_P)
    idx_j = pk_i32[4:5, :]
    valid = idx_i >= 0                                    # padding columns carry -1
    # TODO(synk): self-pairs (r == 0) would still produce inf here, exactly as
    # the torch reference does; add an explicit guard if inputs may contain them.
    d2_safe = jnp.where(valid, d2, 1.0)
    w = jnp.where(valid, scale * lax.rsqrt(d2_safe), 0.0)  # rsqrt -> EUP slot
    return idx_i, idx_j, w


def _coulomb_gs_kernel(pack_ref, q_ref, out_ref, *, scale, full_neighbor_list, n_pad):
    """Gather/scatter path.  grid = (n_slabs["parallel"], tiles_per_slab["arbitrary"]).

    pack_ref : (8, TILE_P)    f32  rows 0-2 xyz, rows 3-4 bitcast(int32) indices
    q_ref    : (N_pad, C_pad) f32  charges (resident across the grid)
    out_ref  : (N_pad, C_pad) f32  per-slab potential accumulator (resident per slab)
    """
    p = pl.program_id(1)

    @pl.when(p == 0)
    def _init():
        out_ref[...] = jnp.zeros_like(out_ref)

    idx_i, idx_j, w = _pair_geometry(pack_ref, scale)

    # Shared (N_pad, 1) iota broadcast against the (1, TILE_P) index rows.
    row = lax.broadcasted_iota(jnp.int32, (n_pad, 1), 0)
    hit_i = row == idx_i                                   # (N_pad, TILE_P)
    hit_j = row == idx_j
    s_i = hit_i.astype(jnp.float32)
    s_j_w = jnp.where(hit_j, w, 0.0)                       # weight folded by one select
    q = q_ref[...]

    # pot[i] += w_p * q[j_p]  ==  s_i @ (s_j_w^T @ q); the gather is expressed
    # via dot_general contracting dims so no operand transpose is materialized.
    g_jw = lax.dot_general(s_j_w, q, (((0,), (0,)), ((), ())),
                           preferred_element_type=jnp.float32)      # (TILE_P, C_pad)
    acc = lax.dot_general(s_i, g_jw, (((1,), (0,)), ((), ())),
                          preferred_element_type=jnp.float32)       # (N_pad, C_pad)

    if not full_neighbor_list:
        # half list symmetrization: pot[j] += w_p * q[i_p]  ==  s_j @ (s_i_w^T @ q)
        s_j = hit_j.astype(jnp.float32)
        s_i_w = jnp.where(hit_i, w, 0.0)
        g_iw = lax.dot_general(s_i_w, q, (((0,), (0,)), ((), ())),
                               preferred_element_type=jnp.float32)
        acc = acc + lax.dot_general(s_j, g_iw, (((1,), (0,)), ((), ())),
                                    preferred_element_type=jnp.float32)

    out_ref[...] += acc


def _coulomb_amat_kernel(pack_ref, q_ref, out_ref, a_acc_ref,
                         *, scale, full_neighbor_list, n_pad):
    """Small-N path: accumulate A[n, m] = sum_p [i_p==n][j_p==m] * w_p, then A @ q."""
    p = pl.program_id(0)

    @pl.when(p == 0)
    def _init():
        a_acc_ref[...] = jnp.zeros_like(a_acc_ref)

    idx_i, idx_j, w = _pair_geometry(pack_ref, scale)
    row = lax.broadcasted_iota(jnp.int32, (n_pad, 1), 0)
    s_i_w = jnp.where(row == idx_i, w, 0.0)                # one-hot(first) * w_p
    s_j = (row == idx_j).astype(jnp.float32)               # one-hot(second)

    # A += s_i_w @ s_j^T, expressed with contracting dims (no materialized transpose).
    a_acc_ref[...] += lax.dot_general(s_i_w, s_j, (((1,), (1,)), ((), ())),
                                      preferred_element_type=jnp.float32)

    @pl.when(p == pl.num_programs(0) - 1)
    def _finalize():
        a = a_acc_ref[...]
        q = q_ref[...]
        pot = lax.dot_general(a, q, (((1,), (0,)), ((), ())),
                              preferred_element_type=jnp.float32)   # A @ q
        if not full_neighbor_list:
            # A^T @ q via contracting dim 0 (no explicit N_pad^2 transpose).
            pot = pot + lax.dot_general(a, q, (((0,), (0,)), ((), ())),
                                        preferred_element_type=jnp.float32)
        out_ref[...] = pot


def calculator_forward(neighbor_values, neighbor_indices, charges,
                       *, prefactor=1.0, full_neighbor_list=False,
                       tile_p=None, path="auto"):
    """JAX/Pallas equivalent of torchpme.metatensor.Calculator.forward.

    neighbor_values  : (P, 3, 1) f32  (TensorBlock values: samples x 'xyz' x 'distance')
    neighbor_indices : (P, 2)    i32  (first_atom, second_atom)
    charges          : (N, C)    f32
    returns          : (N, C)    f32  potential per atom per charge channel
    """
    neighbor_values = jnp.asarray(neighbor_values, jnp.float32)
    neighbor_indices = jnp.asarray(neighbor_indices, jnp.int32)
    charges = jnp.asarray(charges, jnp.float32)

    P = int(neighbor_values.shape[0])
    N, C = charges.shape
    n_pad = max(8, _round_up(N, 8))
    c_pad = max(128, _round_up(C, 128))

    try:
        vmem_cap = int(pltpu.get_tpu_info().vmem_capacity_bytes)
    except Exception:  # pragma: no cover - conservative fallback (v7x per-TC)
        vmem_cap = 64 << 20

    # --- algorithm dispatch + VMEM guard for the quadratic accumulator ------
    a_bytes = n_pad * n_pad * 4
    if path == "auto":
        use_gs = (n_pad > 4 * c_pad) or (a_bytes > vmem_cap // 3)
    elif path == "gather_scatter":
        use_gs = True
    elif path == "a_matrix":
        if a_bytes > vmem_cap // 3:
            raise ValueError("(N_pad, N_pad) accumulator does not fit VMEM; "
                             "use path='gather_scatter'")
        use_gs = False
    else:
        raise ValueError(f"unknown path: {path!r}")

    # --- tile sizing: subtract the resident footprint from the VMEM budget --
    if use_gs:
        resident = 4 * n_pad * c_pad * 4                  # q + out, ~double-buffered
        per_lane = 64 + 20 * n_pad + 8 * c_pad            # stream + one-hots + gathers
    else:
        resident = (n_pad * n_pad + 4 * n_pad * c_pad) * 4
        per_lane = 64 + 16 * n_pad                        # stream + one-hot temporaries

    if tile_p is None:
        budget = int(0.70 * vmem_cap) - resident - (4 << 20)
        tp = _round_down(max(budget, 0) // per_lane, 128)
        tp = max(128, min(tp, 16384))                     # cap scales with VMEM capacity
    else:
        tp = max(128, _round_up(int(tile_p), 128))
    tp = min(tp, _round_up(max(P, 1), 128))

    n_tiles = max(1, -(-P // tp))
    if use_gs:
        n_slabs = 2 if n_tiles >= 2 else 1                # v7x: 2 TCs; serial elsewhere
        tiles_per_slab = -(-n_tiles // n_slabs)
        p_pad = n_slabs * tiles_per_slab * tp
    else:
        n_slabs, tiles_per_slab = 1, n_tiles
        p_pad = n_tiles * tp

    # --- pack the pair stream into one (8, P_pad) f32 array -----------------
    pack = jnp.zeros((8, p_pad), jnp.float32)
    idx = jnp.full((2, p_pad), -1, jnp.int32)
    if P > 0:
        pack = pack.at[0:3, :P].set(neighbor_values[:, :, 0].T)
        idx = idx.at[:, :P].set(neighbor_indices.T)
    pack = pack.at[3:5, :].set(lax.bitcast_convert_type(idx, jnp.float32))
    q = jnp.zeros((n_pad, c_pad), jnp.float32).at[:N, :C].set(charges)

    # explicit scoped-VMEM budget (v5e default is only 16 MiB).
    need = resident + per_lane * tp
    vmem_limit = int(min(int(0.9 * vmem_cap), max(32 << 20, 2 * need)))

    scale = 0.5 * float(prefactor)

    if use_gs:
        kernel = functools.partial(_coulomb_gs_kernel, scale=scale,
                                   full_neighbor_list=bool(full_neighbor_list),
                                   n_pad=n_pad)
        tps = tiles_per_slab  # closed over by the index maps
        out = pl.pallas_call(
            kernel,
            out_shape=jax.ShapeDtypeStruct((n_slabs, n_pad, c_pad), jnp.float32),
            grid_spec=pltpu.PrefetchScalarGridSpec(
                num_scalar_prefetch=0,
                grid=(n_slabs, tiles_per_slab),
                in_specs=[
                    pl.BlockSpec((8, tp), lambda c, p: (0, c * tps + p)),
                    pl.BlockSpec((n_pad, c_pad), lambda c, p: (0, 0)),
                ],
                out_specs=pl.BlockSpec((None, n_pad, c_pad), lambda c, p: (c, 0, 0)),
            ),
            compiler_params=pltpu.CompilerParams(
                dimension_semantics=("parallel", "arbitrary"),
                vmem_limit_bytes=vmem_limit,
            ),
        )(pack, q)
        pot = jnp.sum(out, axis=0)                        # trivial cross-slab add
    else:
        kernel = functools.partial(_coulomb_amat_kernel, scale=scale,
                                   full_neighbor_list=bool(full_neighbor_list),
                                   n_pad=n_pad)
        pot = pl.pallas_call(
            kernel,
            out_shape=jax.ShapeDtypeStruct((n_pad, c_pad), jnp.float32),
            grid_spec=pltpu.PrefetchScalarGridSpec(
                num_scalar_prefetch=0,
                grid=(n_tiles,),
                in_specs=[
                    pl.BlockSpec((8, tp), lambda p: (0, p)),
                    pl.BlockSpec((n_pad, c_pad), lambda p: (0, 0)),
                ],
                out_specs=pl.BlockSpec((n_pad, c_pad), lambda p: (0, 0)),
                scratch_shapes=[pltpu.VMEM((n_pad, n_pad), jnp.float32)],
            ),
            compiler_params=pltpu.CompilerParams(
                dimension_semantics=("arbitrary",),
                vmem_limit_bytes=vmem_limit,
            ),
        )(pack, q)

    return pot[:N, :C]


def _reference(neighbor_values, neighbor_indices, charges,
               prefactor=1.0, full_neighbor_list=False):
    d = jnp.linalg.norm(neighbor_values, axis=1)[:, 0]           # (P,)
    bare = 1.0 / d
    atom_is = neighbor_indices[:, 0]
    atom_js = neighbor_indices[:, 1]
    pot = jnp.zeros_like(charges)
    pot = pot.at[atom_is].add(charges[atom_js] * bare[:, None])
    if not full_neighbor_list:
        pot = pot.at[atom_js].add(charges[atom_is] * bare[:, None])
    return prefactor * pot / 2.0


if __name__ == "__main__":
    key = jax.random.PRNGKey(0)
    k_pos, k_q, k_pos2, k_q2 = jax.random.split(key, 4)

    # --- case 1: small system, single pair tile, auto (A-matrix) path -------
    n_atoms, n_channels = 8, 2
    positions = jax.random.uniform(k_pos, (n_atoms, 3), jnp.float32,
                                   minval=0.0, maxval=4.0)
    charges = jax.random.normal(k_q, (n_atoms, n_channels), jnp.float32)

    ii, jj = np.triu_indices(n_atoms, k=1)
    nbr_idx = jnp.asarray(np.stack([ii, jj], axis=1), jnp.int32)            # (28, 2)
    nbr_val = (positions[nbr_idx[:, 1]] - positions[nbr_idx[:, 0]])[:, :, None]

    pot = jax.block_until_ready(
        calculator_forward(nbr_val, nbr_idx, charges,
                           prefactor=1.0, full_neighbor_list=False))
    ref = _reference(nbr_val, nbr_idx, charges)
    np.testing.assert_allclose(np.asarray(pot), np.asarray(ref), rtol=1e-5, atol=1e-5)

    # --- case 1b: same physics through the gather/scatter kernel with a FULL
    # neighbor list (both pair directions present) ----------------------------
    nbr_idx_full = jnp.concatenate([nbr_idx, nbr_idx[:, ::-1]], axis=0)     # (56, 2)
    nbr_val_full = jnp.concatenate([nbr_val, -nbr_val], axis=0)
    pot_full = jax.block_until_ready(
        calculator_forward(nbr_val_full, nbr_idx_full, charges,
                           full_neighbor_list=True, path="gather_scatter"))
    np.testing.assert_allclose(np.asarray(pot_full), np.asarray(ref),
                               rtol=1e-5, atol=1e-5)

    # --- case 2: 32 atoms on a jittered lattice, 496 pairs, tile_p=128 forces
    # a multi-step accumulating grid; exercise both kernel paths --------------
    gx, gy, gz = np.meshgrid(np.arange(4), np.arange(4), np.arange(2), indexing="ij")
    lattice = np.stack([gx, gy, gz], axis=-1).reshape(-1, 3).astype(np.float32) * 2.0
    positions2 = jnp.asarray(lattice) + jax.random.uniform(
        k_pos2, (32, 3), jnp.float32, minval=-0.3, maxval=0.3)
    charges2 = jax.random.normal(k_q2, (32, 3), jnp.float32)

    ii2, jj2 = np.triu_indices(32, k=1)
    nbr_idx2 = jnp.asarray(np.stack([ii2, jj2], axis=1), jnp.int32)         # (496, 2)
    nbr_val2 = (positions2[nbr_idx2[:, 1]] - positions2[nbr_idx2[:, 0]])[:, :, None]
    ref2 = _reference(nbr_val2, nbr_idx2, charges2)

    # 4 pair tiles -> accumulating A-matrix grid
    pot2a = jax.block_until_ready(
        calculator_forward(nbr_val2, nbr_idx2, charges2, tile_p=128, path="a_matrix"))
    np.testing.assert_allclose(np.asarray(pot2a), np.asarray(ref2),
                               rtol=1e-5, atol=1e-4)

    # 2 slabs x 2 tiles -> "parallel" slab axis + per-slab accumulation
    pot2g = jax.block_until_ready(
        calculator_forward(nbr_val2, nbr_idx2, charges2, tile_p=128,
                           path="gather_scatter"))
    np.testing.assert_allclose(np.asarray(pot2g), np.asarray(ref2),
                               rtol=1e-5, atol=1e-4)

    print("KERNEL_OK")
</pallas_src>

<mosaic_0001>
module attributes {stable_mosaic.version = 11 : i64} {
  func.func @_coulomb_amat_kernel(%arg0: i32, %arg1: memref<8x128xf32, #tpu.memory_space<vmem>>, %arg2: memref<8x128xf32, #tpu.memory_space<vmem>>, %arg3: memref<8x128xf32, #tpu.memory_space<vmem>>, %arg4: memref<8x8xf32, #tpu.memory_space<vmem>>) attributes {dimension_semantics = [#tpu.dimension_semantics<arbitrary>], iteration_bounds = array<i64: 1>, scalar_prefetch = 0 : i64, scratch_operands = 1 : i64, tpu.core_type = #tpu.core_type<tc>, window_params = [{transform_indices = @transform_0, window_bounds = array<i64: 8, 128>}, {pipeline_mode = #tpu.pipeline_mode<synchronous>, transform_indices = @transform_1, window_bounds = array<i64: 8, 128>}, {pipeline_mode = #tpu.pipeline_mode<synchronous>, transform_indices = @transform_2, window_bounds = array<i64: 8, 128>}]} {
    %c0_i32 = arith.constant 0 : i32
    %0 = arith.cmpi eq, %arg0, %c0_i32 : i32
    %1 = arith.extui %0 : i1 to i32
    %c0_i32_0 = arith.constant 0 : i32
    %2 = arith.cmpi ne, %1, %c0_i32_0 : i32
    scf.if %2 {
      %cst_13 = arith.constant 0.000000e+00 : f32
      %44 = vector.broadcast %cst_13 : f32 to vector<8x8xf32>
      %c0_14 = arith.constant 0 : index
      %c0_15 = arith.constant 0 : index
      %45 = vector.load %arg4[%c0_14, %c0_15] : memref<8x8xf32, #tpu.memory_space<vmem>>, vector<8x8xf32>
      tpu.vector_store %arg4[%c0_14, %c0_15], %44 {strides = array<i32>} : memref<8x8xf32, #tpu.memory_space<vmem>>, vector<8x8xf32>,
    } else {
    }
    %c0 = arith.constant 0 : index
    %c0_1 = arith.constant 0 : index
    %3 = vector.load %arg1[%c0, %c0_1] : memref<8x128xf32, #tpu.memory_space<vmem>>, vector<8x128xf32>
    %4 = vector.extract_strided_slice %3 {offsets = [0, 0], sizes = [1, 128], strides = [1, 1]} : vector<8x128xf32> to vector<1x128xf32>
    %5 = vector.extract_strided_slice %3 {offsets = [1, 0], sizes = [1, 128], strides = [1, 1]} : vector<8x128xf32> to vector<1x128xf32>
    %6 = vector.extract_strided_slice %3 {offsets = [2, 0], sizes = [1, 128], strides = [1, 1]} : vector<8x128xf32> to vector<1x128xf32>
    %7 = arith.mulf %4, %4 : vector<1x128xf32>
    %8 = arith.mulf %5, %5 : vector<1x128xf32>
    %9 = arith.addf %7, %8 : vector<1x128xf32>
    %10 = arith.mulf %6, %6 : vector<1x128xf32>
    %11 = arith.addf %9, %10 : vector<1x128xf32>
    %12 = tpu.bitcast %3 : vector<8x128xf32> -> vector<8x128xi32>
    %13 = vector.extract_strided_slice %12 {offsets = [3, 0], sizes = [1, 128], strides = [1, 1]} : vector<8x128xi32> to vector<1x128xi32>
    %14 = vector.extract_strided_slice %12 {offsets = [4, 0], sizes = [1, 128], strides = [1, 1]} : vector<8x128xi32> to vector<1x128xi32>
    %c0_i32_2 = arith.constant 0 : i32
    %15 = vector.broadcast %c0_i32_2 : i32 to vector<1x128xi32>
    %16 = arith.cmpi sge, %13, %15 : vector<1x128xi32>
    %cst = arith.constant 1.000000e+00 : f32
    %17 = vector.broadcast %cst : f32 to vector<1x128xf32>
    %18 = arith.select %16, %11, %17 : vector<1x128xi1>, vector<1x128xf32>
    %19 = math.rsqrt %18 : vector<1x128xf32>
    %cst_3 = arith.constant 5.000000e-01 : f32
    %20 = vector.broadcast %cst_3 : f32 to vector<1x128xf32>
    %21 = arith.mulf %20, %19 : vector<1x128xf32>
    %cst_4 = arith.constant 0.000000e+00 : f32
    %22 = vector.broadcast %cst_4 : f32 to vector<1x128xf32>
    %23 = arith.select %16, %21, %22 : vector<1x128xi1>, vector<1x128xf32>
    %24 = tpu.iota {dimensions = array<i32: 0>} : vector<8x1xi32>
    %25 = vector.broadcast %24 : vector<8x1xi32> to vector<8x128xi32>
    %26 = vector.broadcast %13 : vector<1x128xi32> to vector<8x128xi32>
    %27 = arith.cmpi eq, %25, %26 : vector<8x128xi32>
    %cst_5 = arith.constant 0.000000e+00 : f32
    %28 = vector.shape_cast %23 : vector<1x128xf32> to vector<1x128xf32>
    %29 = vector.broadcast %28 : vector<1x128xf32> to vector<8x128xf32>
    %30 = vector.broadcast %cst_5 : f32 to vector<8x128xf32>
    %31 = arith.select %27, %29, %30 : vector<8x128xi1>, vector<8x128xf32>
    %32 = vector.broadcast %24 : vector<8x1xi32> to vector<8x128xi32>
    %33 = vector.broadcast %14 : vector<1x128xi32> to vector<8x128xi32>
    %34 = arith.cmpi eq, %32, %33 : vector<8x128xi32>
    %35 = arith.extui %34 : vector<8x128xi1> to vector<8x128xi32>
    %36 = arith.sitofp %35 : vector<8x128xi32> to vector<8x128xf32>
    %c0_6 = arith.constant 0 : index
    %c0_7 = arith.constant 0 : index
    %37 = vector.load %arg4[%c0_6, %c0_7] : memref<8x8xf32, #tpu.memory_space<vmem>>, vector<8x8xf32>
    %cst_8 = arith.constant dense<0.000000e+00> : vector<8x8xf32>
    %38 = tpu.matmul %31, %36, %cst_8 {dimension_numbers = #tpu.dot_dimension_numbers<[1], [1], [0], [0], [0, 0, 1, 0], [], []>} : vector<8x128xf32>, vector<8x128xf32>, vector<8x8xf32> -> vector<8x8xf32>
    %39 = arith.addf %37, %38 : vector<8x8xf32>
    %c0_9 = arith.constant 0 : index
    %c0_10 = arith.constant 0 : index
    %40 = vector.load %arg4[%c0_9, %c0_10] : memref<8x8xf32, #tpu.memory_space<vmem>>, vector<8x8xf32>
    tpu.vector_store %arg4[%c0_9, %c0_10], %39 {strides = array<i32>} : memref<8x8xf32, #tpu.memory_space<vmem>>, vector<8x8xf32>,
    %c0_i32_11 = arith.constant 0 : i32
    %41 = arith.cmpi eq, %arg0, %c0_i32_11 : i32
    %42 = arith.extui %41 : i1 to i32
    %c0_i32_12 = arith.constant 0 : i32
    %43 = arith.cmpi ne, %42, %c0_i32_12 : i32
    scf.if %43 {
      %c0_13 = arith.constant 0 : index
      %c0_14 = arith.constant 0 : index
      %44 = vector.load %arg4[%c0_13, %c0_14] : memref<8x8xf32, #tpu.memory_space<vmem>>, vector<8x8xf32>
      %c0_15 = arith.constant 0 : index
      %c0_16 = arith.constant 0 : index
      %45 = vector.load %arg2[%c0_15, %c0_16] : memref<8x128xf32, #tpu.memory_space<vmem>>, vector<8x128xf32>
      %cst_17 = arith.constant dense<0.000000e+00> : vector<8x128xf32>
      %46 = tpu.matmul %44, %45, %cst_17 {dimension_numbers = #tpu.dot_dimension_numbers<[1], [0], [0], [1], [0, 0, 1, 1], [], []>} : vector<8x8xf32>, vector<8x128xf32>, vector<8x128xf32> -> vector<8x128xf32>
      %cst_18 = arith.constant dense<0.000000e+00> : vector<8x128xf32>
      %47 = tpu.matmul %44, %45, %cst_18 {dimension_numbers = #tpu.dot_dimension_numbers<[0], [0], [1], [1], [0, 1, 1, 1], [], []>} : vector<8x8xf32>, vector<8x128xf32>, vector<8x128xf32> -> vector<8x128xf32>
      %48 = arith.addf %46, %47 : vector<8x128xf32>
      %c0_19 = arith.constant 0 : index
      %c0_20 = arith.constant 0 : index
      %49 = vector.load %arg3[%c0_19, %c0_20] : memref<8x128xf32, #tpu.memory_space<vmem>>, vector<8x128xf32>
      tpu.vector_store %arg3[%c0_19, %c0_20], %48 {strides = array<i32>} : memref<8x128xf32, #tpu.memory_space<vmem>>, vector<8x128xf32>,
    } else {
    }
    return
  }
  func.func @transform_0(%arg0: i32) -> (i32, i32) {
    %c0_i32 = arith.constant 0 : i32
    %c0_i32_0 = arith.constant 0 : i32
    return %c0_i32, %arg0 : i32, i32
  }
  func.func @transform_1(%arg0: i32) -> (i32, i32) {
    %c0_i32 = arith.constant 0 : i32
    %c0_i32_0 = arith.constant 0 : i32
    %c0_i32_1 = arith.constant 0 : i32
    return %c0_i32, %c0_i32_0 : i32, i32
  }
  func.func @transform_2(%arg0: i32) -> (i32, i32) {
    %c0_i32 = arith.constant 0 : i32
    %c0_i32_0 = arith.constant 0 : i32
    %c0_i32_1 = arith.constant 0 : i32
    return %c0_i32, %c0_i32_0 : i32, i32
  }
}

</mosaic_0001>

<llo_original>
// kernel: tpu_custom_call.1
$region0: #{tpu_custom_call.1}
  #allocation0 [shape = 'u32[]', space=smem, size = 0x4, offset = 0x4, fixed_abs, tag = 'smem constant byte address 0x4 - core index']
  #allocation1 [shape = 'u32[72,128]{1,0:T(1,128)}', space=vmem, size = 0x9000, scoped, tag = 'internal scratch']
  #allocation2 [shape = 'f32[8,8]{1,0:T(8,128)}', space=vmem, size = 0x1000, scoped, tag = 'scratch operand']
  %s0 = inlined_call_operand.hbm [shape: f32[8,128], index: 0, kind: input, shape index: {}]
  %s1 = inlined_call_operand.hbm [shape: f32[8,128], index: 1, kind: input, shape index: {}]
  %s2 = inlined_call_operand.hbm [shape: f32[8,128], index: 2, kind: output, shape index: {}]
  %s3 = sld [smem:[#allocation0]]
  $region34: #{tpu_custom_call.1} parent=0
    _
  %s5 = ssub.s32 1, %s3
  %s6 = scalar_select 0, %s5, %s3
  $region1: #{tpu_custom_call.1} parent=0
    #allocation3 [shape = 'u8[4096]{0}', space=vmem, size = 0x1000, scoped, tag = 'input window, operand 0, single buffered']
    #allocation4 [shape = 's32[1]{0}', space=sflag, size = 0x4, scoped, tag = 'scoped memory for tpu_custom_call.1']
    #allocation5 [shape = 's32[1]{0}', space=sflag, size = 0x4, scoped, tag = 'scoped memory for tpu_custom_call.1']
    #allocation6 [shape = 'u8[4096]{0}', space=vmem, size = 0x1000, scoped, tag = 'input window, operand 1, single buffered']
    #allocation7 [shape = 's32[1]{0}', space=sflag, size = 0x4, scoped, tag = 'scoped memory for tpu_custom_call.1']
    #allocation8 [shape = 'u8[4096]{0}', space=vmem, size = 0x1000, scoped, tag = 'output window, operand 0, single buffered']
    %7 = vsyncpa [#allocation4], 0
    %8 = vsyncpa [#allocation7], 0
    %9 = vsyncpa [#allocation5], 0
    // Predicated region
    $region2: #{tpu_custom_call.1} parent=1 // pred_check
      _
    $region3: #{tpu_custom_call.1} parent=1 // pred_check_branch
      %11 = sbr.rel (0) target = $region5
    $region4: #{tpu_custom_call.1} parent=1 // pred_region
      %13 = vsyncadd [#allocation4], 0
      %s15 = sshll.u32 %s0, 4
      %s16 = int_to_ptr.hbm [resolvable:$true] %s15
      %s17 = sshll.u32 [#allocation3], 4
      %s18 = int_to_ptr.vmem [resolvable:$true] %s17
      %20 = dma.hbm_to_vmem [thread:$0]  %s16, 128, %s18, [#allocation4]
    $region5: #{tpu_custom_call.1} parent=1 // pred_fallthru
      _
    // Predicated region
    $region6: #{tpu_custom_call.1} parent=1 // pred_check
      _
    $region7: #{tpu_custom_call.1} parent=1 // pred_check_branch
      %22 = sbr.rel (0) target = $region9
    $region8: #{tpu_custom_call.1} parent=1 // pred_region
      %24 = vsyncadd [#allocation7], 0
      %s26 = sshll.u32 %s1, 4
      %s27 = int_to_ptr.hbm [resolvable:$true] %s26
      %s28 = sshll.u32 [#allocation6], 4
      %s29 = int_to_ptr.vmem [resolvable:$true] %s28
      %31 = dma.hbm_to_vmem [thread:$0]  %s27, 128, %s29, [#allocation7]
    $region9: #{tpu_custom_call.1} parent=1 // pred_fallthru
      _
    // Predicated region
    $region10: #{tpu_custom_call.1} parent=1 // pred_check
      _
    $region11: #{tpu_custom_call.1} parent=1 // pred_check_branch
      %33 = sbr.rel (0) target = $region13
    $region12: #{tpu_custom_call.1} parent=1 // pred_region
      %35 = dma.done [#allocation4], 128
    $region13: #{tpu_custom_call.1} parent=1 // pred_fallthru
      _
    // Predicated region
    $region14: #{tpu_custom_call.1} parent=1 // pred_check
      _
    $region15: #{tpu_custom_call.1} parent=1 // pred_check_branch
      %37 = sbr.rel (0) target = $region17
    $region16: #{tpu_custom_call.1} parent=1 // pred_region
      %39 = dma.done [#allocation7], 128
    $region17: #{tpu_custom_call.1} parent=1 // pred_fallthru
      _
    %p40 = scmp.eq.s32.totalorder 0, 0
    // Predicated region
    $region18: #{tpu_custom_call.1} parent=1 // pred_check
      %p41 = pneg %p40
    $region19: #{tpu_custom_call.1} parent=1 // pred_check_branch
      %43 = sbr.rel (%p41) target = $region21
    $region20: #{tpu_custom_call.1} parent=1 // pred_region
      %vm44 = vcmask 64512
      %45 = vst.msk [vmem:[#allocation2] sm:$0xff] %vm44, 0.0
    $region21: #{tpu_custom_call.1} parent=1 // pred_fallthru
      _
    %v46 = vld [vmem:[#allocation3] sm:$0xff]
    %v47 = vmul.f32 %v46, %v46
    %v49 = vrot.slane %v47, 1
    %v51 = vadd.f32 %v47, %v49
    %v52 = vrot.slane %v47, 2
    %v54 = vadd.f32 %v51, %v52
    %vm56 = vcmp.ge.s32.totalorder %v46, 0
    %v58 = vrot.slane %v54, 5
    %v60 = vsel %vm56, %v58, 1.0
    %v61 = vrsqrt.pop %v60
    %v62 = vmul.f32 %v61, %v60
    %v63 = vmul.f32 %v62, %v61
    %v64 = vmul.f32 0.5, %v63
    %v65 = vsub.f32 1.5, %v64
    %v66 = vmul.f32 %v61, %v65
    %vm67 = vweird.f32 %v60
    %vm68 = vweird.f32 %v61
    %vm69 = vmor %vm67, %vm68
    %v70 = vsel %vm69, %v61, %v66
    %v71 = vmul.f32 %v70, 0.5
    %v72 = vsel %vm56, %v71, 0.0
    %v73 = vlaneseq
    %v74 = vshrl.u32 %v73, 7
    %v75 = vperm.slane %v46, 3
    %vm76 = vcmp.eq.s32.totalorder %v74, %v75
    %v77 = vperm.slane %v72, 3
    %v78 = vsel %vm76, %v77, 0.0
    %v79 = vperm.slane %v46, 4
    %vm80 = vcmp.eq.s32.totalorder %v74, %v79
    %v81 = vsel %vm80, 1, 0
    %v82 = vcvt.s32.f32 %v81
    %v83 = vld [vmem:[#allocation2] sm:$0xff]
    %84 = vmatpush.xpose.msra.mxu0 0.0
    %85 = vmatpush.xpose.msra.mxu0 0.0
    %86 = vmatpush.xpose.msra.mxu0 0.0
    %87 = vmatpush.xpose.msra.mxu0 0.0
    %88 = vmatpush.xpose.msra.mxu0 0.0
    %89 = vmatpush.xpose.msra.mxu0 0.0
    %90 = vmatpush.xpose.msra.mxu0 0.0
    %91 = vmatpush.xpose.msra.mxu0 0.0
    %92 = vmatpush.xpose.msra.mxu0 0.0
    %93 = vmatpush.xpose.msra.mxu0 0.0
    %94 = vmatpush.xpose.msra.mxu0 0.0
    %95 = vmatpush.xpose.msra.mxu0 0.0
    %96 = vmatpush.xpose.msra.mxu0 0.0
    %97 = vmatpush.xpose.msra.mxu0 0.0
    %98 = vmatpush.xpose.msra.mxu0 0.0
    %99 = vmatpush.xpose.msra.mxu0 %v82
    %100 = vmatmul.f32.gmra.mxu0 %v78
    %v101 = vpop.f32.mrf.mxu0
    %v102 = vadd.f32 0.0, %v101
    %103 = vdwg.mxu0
    %v104 = vadd.f32 %v83, %v102
    %vm105 = vcmask 64512
    %106 = vst.msk [vmem:[#allocation2] sm:$0xff] %vm105, %v104
    // Predicated region
    $region22: #{tpu_custom_call.1} parent=1 // pred_check
      %p107 = pneg %p40
    $region23: #{tpu_custom_call.1} parent=1 // pred_check_branch
      %109 = sbr.rel (%p107) target = $region25
    $region24: #{tpu_custom_call.1} parent=1 // pred_region
      %v110 = vld [vmem:[#allocation2] sm:$0xff]
      %v111 = vld [vmem:[#allocation6] sm:$0xff]
      %112 = vxpose.xlu0.b32.start [1/16] %v110, 128
      %113 = vxpose.xlu0.b32.cont [2/16] 0.0, 128
      %114 = vxpose.xlu0.b32.cont [3/16] 0.0, 128
      %115 = vxpose.xlu0.b32.cont [4/16] 0.0, 128
      %116 = vxpose.xlu0.b32.cont [5/16] 0.0, 128
      %117 = vxpose.xlu0.b32.cont [6/16] 0.0, 128
      %118 = vxpose.xlu0.b32.cont [7/16] 0.0, 128
      %119 = vxpose.xlu0.b32.cont [8/16] 0.0, 128
      %120 = vxpose.xlu0.b32.cont [9/16] 0.0, 128
      %121 = vxpose.xlu0.b32.cont [10/16] 0.0, 128
      %122 = vxpose.xlu0.b32.cont [11/16] 0.0, 128
      %123 = vxpose.xlu0.b32.cont [12/16] 0.0, 128
      %124 = vxpose.xlu0.b32.cont [13/16] 0.0, 128
      %125 = vxpose.xlu0.b32.cont [14/16] 0.0, 128
      %126 = vxpose.xlu0.b32.cont [15/16] 0.0, 128
      %127 = vxpose.xlu0.b32.end [16/16] 0.0, 128
      %v128 = vpop.trf.xlu0
      %v129 = vpop.trf.xlu0
      %v130 = vpop.trf.xlu0
      %v131 = vpop.trf.xlu0
      %v132 = vpop.trf.xlu0
      %v133 = vpop.trf.xlu0
      %v134 = vpop.trf.xlu0
      %v135 = vpop.trf.xlu0
      %v136 = vpop.trf.xlu0
      %v137 = vpop.trf.xlu0
      %v138 = vpop.trf.xlu0
      %v139 = vpop.trf.xlu0
      %v140 = vpop.trf.xlu0
      %v141 = vpop.trf.xlu0
      %v142 = vpop.trf.xlu0
      %v143 = vpop.trf.xlu0
      %v145 = vsel %vm105, %v128, 0
      %147 = vmatpush.msra.mxu0 0.0
      %148 = vmatpush.msra.mxu0 0.0
      %149 = vmatpush.msra.mxu0 0.0
      %150 = vmatpush.msra.mxu0 0.0
      %151 = vmatpush.msra.mxu0 0.0
      %152 = vmatpush.msra.mxu0 0.0
      %153 = vmatpush.msra.mxu0 0.0
      %154 = vmatpush.msra.mxu0 0.0
      %155 = vmatpush.msra.mxu0 0.0
      %156 = vmatpush.msra.mxu0 0.0
      %157 = vmatpush.msra.mxu0 0.0
      %158 = vmatpush.msra.mxu0 0.0
      %159 = vmatpush.msra.mxu0 0.0
      %160 = vmatpush.msra.mxu0 0.0
      %161 = vmatpush.msra.mxu0 0.0
      %162 = vmatpush.msra.mxu0 %v111
      %163 = vmatmul.f32.gmra.mxu0 %v145
      %v164 = vpop.f32.mrf.mxu0
      %v165 = vadd.f32 0.0, %v164
      %166 = vdwg.mxu0
      %v168 = vsel %vm105, %v110, 0
      %170 = vmatpush.msra.mxu0 0.0
      %171 = vmatpush.msra.mxu0 0.0
      %172 = vmatpush.msra.mxu0 0.0
      %173 = vmatpush.msra.mxu0 0.0
      %174 = vmatpush.msra.mxu0 0.0
      %175 = vmatpush.msra.mxu0 0.0
      %176 = vmatpush.msra.mxu0 0.0
      %177 = vmatpush.msra.mxu0 0.0
      %178 = vmatpush.msra.mxu0 0.0
      %179 = vmatpush.msra.mxu0 0.0
      %180 = vmatpush.msra.mxu0 0.0
      %181 = vmatpush.msra.mxu0 0.0
      %182 = vmatpush.msra.mxu0 0.0
      %183 = vmatpush.msra.mxu0 0.0
      %184 = vmatpush.msra.mxu0 0.0
      %185 = vmatpush.msra.mxu0 %v111
      %186 = vmatmul.f32.gmra.mxu0 %v168
      %v187 = vpop.f32.mrf.mxu0
      %v188 = vadd.f32 %v165, %v187
      %189 = vdwg.mxu0
      %190 = vst [vmem:[#allocation8] sm:$0xff] %v188
    $region25: #{tpu_custom_call.1} parent=1 // pred_fallthru
      _
    // Predicated region
    $region26: #{tpu_custom_call.1} parent=1 // pred_check
      _
    $region27: #{tpu_custom_call.1} parent=1 // pred_check_branch
      %192 = sbr.rel (0) target = $region29
    $region28: #{tpu_custom_call.1} parent=1 // pred_region
      %194 = vsyncadd [#allocation5], 0
      %s196 = sshll.u32 [#allocation8], 4
      %s197 = int_to_ptr.vmem [resolvable:$true] %s196
      %s198 = sshll.u32 %s2, 4
      %s199 = int_to_ptr.hbm [resolvable:$true] %s198
      %201 = dma.vmem_to_hbm [thread:$0]  %s197, 128, %s199, [#allocation5]
    $region29: #{tpu_custom_call.1} parent=1 // pred_fallthru
      _
    // Predicated region
    $region30: #{tpu_custom_call.1} parent=1 // pred_check
      _
    $region31: #{tpu_custom_call.1} parent=1 // pred_check_branch
      %203 = sbr.rel (0) target = $region33
    $region32: #{tpu_custom_call.1} parent=1 // pred_region
      %205 = dma.done [#allocation5], 128
    $region33: #{tpu_custom_call.1} parent=1 // pred_fallthru
      _
    %206 = vsyncpa [#allocation4], 1
    %207 = vsyncpa [#allocation7], 1
    %208 = vsyncpa [#allocation5], 1

</llo_original>
